<compile_context>
chip_gen: v5e
topology: v5e:2x2
jax: 0.10.0
libtpu: 0.0.40
codegen_flags: <defaults>
</compile_context>

<pallas_src>
import functools

import numpy as np
import jax
import jax.numpy as jnp
from jax.experimental import pallas as pl
from jax.experimental.pallas import tpu as pltpu


def make_pe_table(pad_size: int, embed: int) -> jnp.ndarray:
    """Deterministic sinusoidal PE table, same formula as the PyTorch __init__."""
    pos = np.arange(pad_size, dtype=np.float64)[:, None]
    i = np.arange(embed, dtype=np.float64)[None, :]
    angle = pos / (10000.0 ** ((i // 2) * 2.0 / embed))
    pe = np.empty((pad_size, embed), dtype=np.float64)
    pe[:, 0::2] = np.sin(angle[:, 0::2])
    pe[:, 1::2] = np.cos(angle[:, 1::2])
    return jnp.asarray(pe, dtype=np.float32)


def _posenc_kernel(x_ref, pe_ref, o_ref):
    # x_ref: (TB, TC), pe_ref: (1, TC) -> broadcast add over rows.
    o_ref[...] = (x_ref[...] + pe_ref[...]).astype(o_ref.dtype)


def _posenc_dropout_kernel(x_ref, pe_ref, bits_ref, o_ref, *, scale, threshold):
    # Fused add + inverted dropout. keep iff bits >= threshold (P(drop) ~= p).
    out = x_ref[...] + pe_ref[...]
    keep = bits_ref[...] >= jnp.uint32(threshold)
    o_ref[...] = jnp.where(keep, out * jnp.float32(scale),
                           jnp.zeros_like(out)).astype(o_ref.dtype)


def positional_encoding(x, pe, dropout_p: float = 0.0, rng_key=None):
    """x: (B, L, E) float32, pe: (L, E) float32.  Returns dropout(x + pe)."""
    B, L, E = x.shape
    assert pe.shape == (L, E)
    LE = L * E

    # Flatten to a lane-dense 2-D layout; PE broadcasts over the row (batch) axis.
    x2 = x.reshape(B, LE)
    pe2 = pe.reshape(1, LE)

    # Large blocks sized well within the smallest (v7x) VMEM budget.
    TB = B if B <= 256 else 256           # multiple of 8 (or full dim)
    TC = LE if LE <= 4096 else 4096       # multiple of 128 (or full dim)
    grid = (pl.cdiv(B, TB), pl.cdiv(LE, TC))

    x_spec = pl.BlockSpec((TB, TC), lambda i, j: (i, j))
    pe_spec = pl.BlockSpec((1, TC), lambda i, j: (0, j))
    out_spec = pl.BlockSpec((TB, TC), lambda i, j: (i, j))

    compiler_params = pltpu.CompilerParams(
        dimension_semantics=("parallel", "parallel"),
        vmem_limit_bytes=32 * 1024 * 1024,
    )

    itemsize = jnp.dtype(x.dtype).itemsize
    p = float(dropout_p)

    if p <= 0.0:
        cost = pl.CostEstimate(
            flops=B * LE,
            transcendentals=0,
            bytes_accessed=2 * B * LE * itemsize + LE * 4,
        )
        out2 = pl.pallas_call(
            _posenc_kernel,
            out_shape=jax.ShapeDtypeStruct((B, LE), x.dtype),
            grid=grid,
            in_specs=[x_spec, pe_spec],
            out_specs=out_spec,
            compiler_params=compiler_params,
            cost_estimate=cost,
        )(x2, pe2)
    else:
        if rng_key is None:
            rng_key = jax.random.PRNGKey(0)
        # Random bits generated outside the kernel (portable across interpret/TPU).
        bits = jax.random.bits(rng_key, (B, LE), dtype=jnp.uint32)
        threshold = min(int(round(p * 2.0 ** 32)), 2 ** 32 - 1)
        scale = 1.0 / (1.0 - p)
        kernel = functools.partial(_posenc_dropout_kernel,
                                   scale=scale, threshold=threshold)
        cost = pl.CostEstimate(
            flops=3 * B * LE,
            transcendentals=0,
            bytes_accessed=2 * B * LE * itemsize + B * LE * 4 + LE * 4,
        )
        out2 = pl.pallas_call(
            kernel,
            out_shape=jax.ShapeDtypeStruct((B, LE), x.dtype),
            grid=grid,
            in_specs=[x_spec, pe_spec, pl.BlockSpec((TB, TC), lambda i, j: (i, j))],
            out_specs=out_spec,
            compiler_params=compiler_params,
            cost_estimate=cost,
        )(x2, pe2, bits)

    return out2.reshape(B, L, E)


if __name__ == "__main__":
    batch, pad_size, embed = 2, 8, 32
    dropout = 0.1

    key = jax.random.PRNGKey(0)
    kx, kd = jax.random.split(key)
    x = jax.random.normal(kx, (batch, pad_size, embed), dtype=jnp.float32)
    pe = make_pe_table(pad_size, embed)
    ref = np.asarray(x + pe[None, :, :])

    # Eval-mode path (dropout is identity) -- exact add semantics.
    out_eval = positional_encoding(x, pe, dropout_p=0.0)
    out_eval = jax.block_until_ready(out_eval)
    np.testing.assert_allclose(np.asarray(out_eval), ref, rtol=1e-6, atol=1e-6)

    # Train-mode path (fused inverted dropout inside the kernel).
    out_train = positional_encoding(x, pe, dropout_p=dropout, rng_key=kd)
    out_train = jax.block_until_ready(out_train)
    assert out_train.shape == (batch, pad_size, embed)
    o = np.asarray(out_train)
    kept = o != 0.0
    # Kept elements must equal (x + pe) / (1 - p); dropped ones are zero.
    np.testing.assert_allclose(o[kept], ref[kept] / (1.0 - dropout),
                               rtol=1e-5, atol=1e-5)

    print("KERNEL_OK")
</pallas_src>

<mosaic_0001>
module attributes {stable_mosaic.version = 11 : i64} {
  func.func @_posenc_kernel(%arg0: i32, %arg1: i32, %arg2: memref<2x256xf32, #tpu.memory_space<vmem>>, %arg3: memref<1x256xf32, #tpu.memory_space<vmem>>, %arg4: memref<2x256xf32, #tpu.memory_space<vmem>>) attributes {dimension_semantics = [#tpu.dimension_semantics<parallel>, #tpu.dimension_semantics<parallel>], iteration_bounds = array<i64: 1, 1>, scalar_prefetch = 0 : i64, scratch_operands = 0 : i64, tpu.core_type = #tpu.core_type<tc>, window_params = [{transform_indices = @transform_0, window_bounds = array<i64: 2, 256>}, {transform_indices = @transform_1, window_bounds = array<i64: 1, 256>}, {transform_indices = @transform_2, window_bounds = array<i64: 2, 256>}]} {
    %c0 = arith.constant 0 : index
    %c0_0 = arith.constant 0 : index
    %0 = vector.load %arg2[%c0, %c0_0] : memref<2x256xf32, #tpu.memory_space<vmem>>, vector<2x256xf32>
    %c0_1 = arith.constant 0 : index
    %c0_2 = arith.constant 0 : index
    %1 = vector.load %arg3[%c0_1, %c0_2] : memref<1x256xf32, #tpu.memory_space<vmem>>, vector<1x256xf32>
    %2 = vector.broadcast %1 : vector<1x256xf32> to vector<2x256xf32>
    %3 = arith.addf %0, %2 : vector<2x256xf32>
    %c0_3 = arith.constant 0 : index
    %c0_4 = arith.constant 0 : index
    %4 = vector.load %arg4[%c0_3, %c0_4] : memref<2x256xf32, #tpu.memory_space<vmem>>, vector<2x256xf32>
    tpu.vector_store %arg4[%c0_3, %c0_4], %3 {strides = array<i32>} : memref<2x256xf32, #tpu.memory_space<vmem>>, vector<2x256xf32>,
    return
  }
  func.func @transform_0(%arg0: i32, %arg1: i32) -> (i32, i32) {
    %c0_i32 = arith.constant 0 : i32
    return %arg0, %arg1 : i32, i32
  }
  func.func @transform_1(%arg0: i32, %arg1: i32) -> (i32, i32) {
    %c0_i32 = arith.constant 0 : i32
    %c0_i32_0 = arith.constant 0 : i32
    return %c0_i32, %arg1 : i32, i32
  }
  func.func @transform_2(%arg0: i32, %arg1: i32) -> (i32, i32) {
    %c0_i32 = arith.constant 0 : i32
    return %arg0, %arg1 : i32, i32
  }
}

</mosaic_0001>

<llo_original>
// kernel: tpu_custom_call.1
$region0: #{tpu_custom_call.1}
  #allocation0 [shape = 'u32[]', space=smem, size = 0x4, offset = 0x4, fixed_abs, tag = 'smem constant byte address 0x4 - core index']
  #allocation1 [shape = 'u32[72,128]{1,0:T(1,128)}', space=vmem, size = 0x9000, scoped, tag = 'internal scratch']
  %s0 = inlined_call_operand.hbm [shape: f32[2,256], index: 0, kind: input, shape index: {}]
  %s1 = inlined_call_operand.hbm [shape: f32[1,256], index: 1, kind: input, shape index: {}]
  %s2 = inlined_call_operand.hbm [shape: f32[2,256], index: 2, kind: output, shape index: {}]
  %s3 = sld [smem:[#allocation0]]
  $region26: #{tpu_custom_call.1} parent=0
    _
  %s5 = ssub.s32 1, %s3
  %s6 = scalar_select 0, %s5, %s3
  $region1: #{tpu_custom_call.1} parent=0
    #allocation2 [shape = 'u8[2048]{0}', space=vmem, size = 0x800, scoped, tag = 'input window, operand 0, single buffered']
    #allocation3 [shape = 's32[1]{0}', space=sflag, size = 0x4, scoped, tag = 'scoped memory for tpu_custom_call.1']
    #allocation4 [shape = 's32[1]{0}', space=sflag, size = 0x4, scoped, tag = 'scoped memory for tpu_custom_call.1']
    #allocation5 [shape = 'u8[1024]{0}', space=vmem, size = 0x400, scoped, tag = 'input window, operand 1, single buffered']
    #allocation6 [shape = 's32[1]{0}', space=sflag, size = 0x4, scoped, tag = 'scoped memory for tpu_custom_call.1']
    #allocation7 [shape = 'u8[2048]{0}', space=vmem, size = 0x800, scoped, tag = 'output window, operand 0, single buffered']
    %7 = vsyncpa [#allocation3], 0
    %8 = vsyncpa [#allocation6], 0
    %9 = vsyncpa [#allocation4], 0
    // Predicated region
    $region2: #{tpu_custom_call.1} parent=1 // pred_check
      _
    $region3: #{tpu_custom_call.1} parent=1 // pred_check_branch
      %11 = sbr.rel (0) target = $region5
    $region4: #{tpu_custom_call.1} parent=1 // pred_region
      %13 = vsyncadd [#allocation3], 0
      %s15 = sshll.u32 %s0, 4
      %s16 = int_to_ptr.hbm [resolvable:$true] %s15
      %s17 = sshll.u32 [#allocation2], 4
      %s18 = int_to_ptr.vmem [resolvable:$true] %s17
      %20 = dma.hbm_to_vmem [thread:$0]  %s16, 64, %s18, [#allocation3]
    $region5: #{tpu_custom_call.1} parent=1 // pred_fallthru
      _
    // Predicated region
    $region6: #{tpu_custom_call.1} parent=1 // pred_check
      _
    $region7: #{tpu_custom_call.1} parent=1 // pred_check_branch
      %22 = sbr.rel (0) target = $region9
    $region8: #{tpu_custom_call.1} parent=1 // pred_region
      %24 = vsyncadd [#allocation6], 0
      %s26 = sshll.u32 %s1, 4
      %s27 = int_to_ptr.hbm [resolvable:$true] %s26
      %s28 = sshll.u32 [#allocation5], 4
      %s29 = int_to_ptr.vmem [resolvable:$true] %s28
      %31 = dma.hbm_to_vmem [thread:$0]  %s27, 32, %s29, [#allocation6]
    $region9: #{tpu_custom_call.1} parent=1 // pred_fallthru
      _
    // Predicated region
    $region10: #{tpu_custom_call.1} parent=1 // pred_check
      _
    $region11: #{tpu_custom_call.1} parent=1 // pred_check_branch
      %33 = sbr.rel (0) target = $region13
    $region12: #{tpu_custom_call.1} parent=1 // pred_region
      %35 = dma.done [#allocation3], 64
    $region13: #{tpu_custom_call.1} parent=1 // pred_fallthru
      _
    // Predicated region
    $region14: #{tpu_custom_call.1} parent=1 // pred_check
      _
    $region15: #{tpu_custom_call.1} parent=1 // pred_check_branch
      %37 = sbr.rel (0) target = $region17
    $region16: #{tpu_custom_call.1} parent=1 // pred_region
      %39 = dma.done [#allocation6], 32
    $region17: #{tpu_custom_call.1} parent=1 // pred_fallthru
      _
    %v40 = vld [vmem:[#allocation2] sm:$0xf]
    %v41 = vld [vmem:[#allocation5] sm:$0x3]
    %v43 = vperm.slane %v41, 0
    %v44 = vperm.slane %v41, 1
    %v45 = vrot.slane %v44, 6
    %vm46 = vcmask 1041408
    %v47 = vsel %vm46, %v43, %v45
    %v49 = vadd.f32 %v40, %v47
    %50 = vst [vmem:[#allocation7] sm:$0xf] %v49
    // Predicated region
    $region18: #{tpu_custom_call.1} parent=1 // pred_check
      _
    $region19: #{tpu_custom_call.1} parent=1 // pred_check_branch
      %52 = sbr.rel (0) target = $region21
    $region20: #{tpu_custom_call.1} parent=1 // pred_region
      %54 = vsyncadd [#allocation4], 0
      %s56 = sshll.u32 [#allocation7], 4
      %s57 = int_to_ptr.vmem [resolvable:$true] %s56
      %s58 = sshll.u32 %s2, 4
      %s59 = int_to_ptr.hbm [resolvable:$true] %s58
      %61 = dma.vmem_to_hbm [thread:$0]  %s57, 64, %s59, [#allocation4]
    $region21: #{tpu_custom_call.1} parent=1 // pred_fallthru
      _
    // Predicated region
    $region22: #{tpu_custom_call.1} parent=1 // pred_check
      _
    $region23: #{tpu_custom_call.1} parent=1 // pred_check_branch
      %63 = sbr.rel (0) target = $region25
    $region24: #{tpu_custom_call.1} parent=1 // pred_region
      %65 = dma.done [#allocation4], 64
    $region25: #{tpu_custom_call.1} parent=1 // pred_fallthru
      _
    %66 = vsyncpa [#allocation3], 1
    %67 = vsyncpa [#allocation6], 1
    %68 = vsyncpa [#allocation4], 1

</llo_original>
